<compile_context>
chip_gen: v7x
topology: tpu7x:2x2x1
jax: 0.10.0
libtpu: 0.0.40
codegen_flags: <defaults>
</compile_context>

<pallas_src>
import functools

import jax
import jax.numpy as jnp
from jax import lax
from jax.experimental import pallas as pl
from jax.experimental.pallas import tpu as pltpu

EMB_DIM = 300   # word_emb_dim == sent_emb_dim in the module
LANE = 128


def _vmem_capacity_bytes():
    """Per-TensorCore VMEM capacity; conservative fallback if query fails."""
    try:
        return int(pltpu.get_tpu_info().vmem_capacity_bytes)
    except Exception:
        return 64 << 20      # v7x-sized (smallest of v5e/v6e/v7x)


# ---------------------------------------------------------------------------
# Fast path: the (padded) embedding table is resident in VMEM -> no DMAs.
# ---------------------------------------------------------------------------
def _sent_mean_vmem_kernel(T, L, Dpad,
                           idx_sref, len_sref,     # scalar prefetch (SMEM)
                           emb_ref,                # whole table, VMEM resident
                           out_ref):               # (T, Dpad) output block
    t = pl.program_id(0)
    base = t * T * L

    def one_sentence(s, carry):
        n = len_sref[t * T + s]                    # valid words in sentence s
        acc = jnp.zeros((1, Dpad), jnp.float32)
        for w in range(L):                         # static unroll, branch-free
            wid = idx_sref[base + s * L + w]       # padded slots hold id 0
            row = emb_ref[pl.ds(wid, 1), :]        # dynamic-row VMEM load
            acc = acc + jnp.where(w < n, row, 0.0)
        # zero-length (padding-only) sentences -> 0 (intentional divergence
        # from the PyTorch divide-by-zero).
        inv = 1.0 / jnp.maximum(n, 1).astype(jnp.float32)
        out_ref[pl.ds(s, 1), :] = acc * inv
        return carry

    lax.fori_loop(0, T, one_sentence, 0)


# ---------------------------------------------------------------------------
# General path: table stays in HBM, rows gathered with async DMAs.
# ---------------------------------------------------------------------------
def _sent_mean_hbm_kernel(T, L, Dpad,
                          idx_sref, len_sref,      # scalar prefetch (SMEM)
                          len_vref, emb_hbm,       # (T,1) lens block / HBM table
                          out_ref,                 # (T, Dpad) output block
                          rows, sem):              # (L*T, Dpad) gather buf + sem
    t = pl.program_id(0)
    base = t * T * L

    # Issue all T*L row gathers (padded slots fetch the sanitized id 0; the
    # tiny extra HBM traffic is cheaper than per-slot branches).  Word loop
    # statically unrolled; sentence loop rolled to bound code size.
    def issue_sentence(s, carry):
        for w in range(L):                         # static unroll
            wid = idx_sref[base + s * L + w]
            pltpu.make_async_copy(emb_hbm.at[pl.ds(wid, 1)],
                                  rows.at[pl.ds(w * T + s, 1)],
                                  sem.at[0]).start()
        return carry

    lax.fori_loop(0, T, issue_sentence, 0)

    # ONE aggregate wait: each copy signals sem with exactly Dpad*4 bytes, so
    # waiting on a descriptor with the full `rows` byte count (L*T rows)
    # consumes exactly the sum of all signals.  The descriptor is only used
    # for its byte count; it is never started.
    pltpu.make_async_copy(rows, rows, sem.at[0]).wait()

    # Masked mean over the word axis; single lane-dense (T, Dpad) store.
    lens = len_vref[...]                                        # (T, 1) int32
    inv_len = 1.0 / jnp.maximum(lens, 1).astype(jnp.float32)    # 0-len pads -> 0
    acc = jnp.zeros((T, Dpad), jnp.float32)
    for w in range(L):                                          # static unroll
        acc = acc + jnp.where(lens > w, rows[pl.ds(w * T, T), :], 0.0)
    out_ref[...] = acc * inv_len


def sentence_embeddings(word_emb, word_ids, lengths, *, tile_sents=32,
                        force_hbm_table=False):
    """Mean word embedding per sentence.

    word_emb : (V, D)  f32  embedding table
    word_ids : (BS, L) i32  word indices per sentence (entries past `lengths`
                            are ignored / may hold anything in-range)
    lengths  : (BS,)   i32  number of valid words per sentence
    returns  : (BS, D) f32  sentence embeddings
    """
    word_emb = word_emb.astype(jnp.float32)
    word_ids = word_ids.astype(jnp.int32)
    lengths = lengths.astype(jnp.int32)
    BS, L = word_ids.shape
    V, D = word_emb.shape

    Dpad = pl.cdiv(D, LANE) * LANE                # 300 -> 384, lane-dense blocks

    # Tile size: multiple of 8 (sublane), <= tile_sents, and small enough to
    # keep >= 2 grid steps when possible (feeds v7x's second TensorCore).
    T = min(tile_sents, max(8, pl.cdiv(pl.cdiv(BS, 2), 8) * 8))
    num_tiles = pl.cdiv(BS, T)
    BSp = num_tiles * T

    # Sanitize padded word slots to id 0 (a valid row) so the gather is
    # branch-free in the kernel; they are masked out of the mean there.
    word_pos = jnp.arange(L, dtype=jnp.int32)[None, :]
    ids_sane = jnp.where(word_pos < lengths[:, None], word_ids, 0)

    emb_pad = jnp.pad(word_emb, ((0, 0), (0, Dpad - D)))
    ids_pad = jnp.pad(ids_sane, ((0, BSp - BS), (0, 0)))
    lens_pad = jnp.pad(lengths, (0, BSp - BS))

    # TODO(synk): for very large BS*L, chunk the batch in this wrapper — the
    # flat id array is scalar-prefetched into SMEM (pads to next-pow2 bytes).
    flat_ids = ids_pad.reshape(-1)                # (BSp*L,) SMEM: drives gathers
    lens_col = lens_pad.reshape(BSp, 1)           # (BSp, 1) VMEM: drives the mask

    cap = _vmem_capacity_bytes()
    table_bytes = V * Dpad * 4
    rows_bytes = L * T * Dpad * 4
    use_vmem_table = (not force_hbm_table) and (table_bytes <= int(0.35 * cap))

    if use_vmem_table:
        # Table resident in VMEM (constant block index -> fetched once);
        # gather = dynamic in-kernel row loads, no DMA descriptors at all.
        kernel = functools.partial(_sent_mean_vmem_kernel, T, L, Dpad)
        grid_spec = pltpu.PrefetchScalarGridSpec(
            num_scalar_prefetch=2,                # flat_ids, lens_pad
            grid=(num_tiles,),
            in_specs=[pl.BlockSpec((V, Dpad), lambda t, idx, ln: (0, 0))],
            out_specs=pl.BlockSpec((T, Dpad), lambda t, idx, ln: (t, 0)),
        )
        operands = (flat_ids, lens_pad, emb_pad)
        vmem_limit = min(int(0.9 * cap), 2 * table_bytes + (8 << 20))
    else:
        # Table stays in HBM; rows gathered with manual async DMAs.
        kernel = functools.partial(_sent_mean_hbm_kernel, T, L, Dpad)
        grid_spec = pltpu.PrefetchScalarGridSpec(
            num_scalar_prefetch=2,                # flat_ids, lens_pad
            grid=(num_tiles,),
            in_specs=[
                pl.BlockSpec((T, 1), lambda t, idx, ln: (t, 0)),  # lens block
                pl.BlockSpec(memory_space=pl.ANY),                # table in HBM
            ],
            out_specs=pl.BlockSpec((T, Dpad), lambda t, idx, ln: (t, 0)),
            scratch_shapes=[
                pltpu.VMEM((L * T, Dpad), jnp.float32),   # gathered rows
                pltpu.SemaphoreType.DMA((1,)),
            ],
        )
        operands = (flat_ids, lens_pad, lens_col, emb_pad)
        vmem_limit = min(int(0.9 * cap), (32 << 20) + 4 * rows_bytes)

    out = pl.pallas_call(
        kernel,
        out_shape=jax.ShapeDtypeStruct((BSp, Dpad), jnp.float32),
        grid_spec=grid_spec,
        compiler_params=pltpu.CompilerParams(
            dimension_semantics=("parallel",),    # split tiles across TCs
            vmem_limit_bytes=int(vmem_limit)),
    )(*operands)

    return out[:BS, :D]


def baseline_forward(word_emb, hypo_ids, hypo_lens, **kwargs):
    """Equivalent of BaselineModel.forward: hypothesis sentence embeddings.

    hypo_ids : (B, S, L) i32, hypo_lens : (B, S) i32  ->  (B, S, D) f32
    (forward() only returns the hypothesis sentence embeddings; the paragraph
     branch would reuse the identical kernel.)
    """
    B, S, L = hypo_ids.shape
    out = sentence_embeddings(word_emb, hypo_ids.reshape(B * S, L),
                              hypo_lens.reshape(B * S), **kwargs)
    return out.reshape(B, S, out.shape[-1])


if __name__ == "__main__":
    key = jax.random.PRNGKey(0)
    k1, k2, k3 = jax.random.split(key, 3)

    # Small synthetic shapes (real model: vocab 517015; here a small table).
    V, D = 1024, EMB_DIM
    B, S, L = 2, 5, 16   # 2 instances, 5 hypothesis sentences, <=16 words each

    word_emb = jax.random.normal(k1, (V, D), dtype=jnp.float32)
    hypo_lens = jax.random.randint(k2, (B, S), 1, L + 1)
    hypo_ids = jax.random.randint(k3, (B, S, L), 0, V)

    # Exercise both paths: VMEM-resident-table fast path and the HBM DMA path.
    out_fast = baseline_forward(word_emb, hypo_ids, hypo_lens)
    out_hbm = baseline_forward(word_emb, hypo_ids, hypo_lens,
                               force_hbm_table=True)
    out_fast, out_hbm = jax.block_until_ready((out_fast, out_hbm))

    # Pure-JAX reference (mirrors np.sum(sent, 0) / len(sent) on embeddings).
    mask = (jnp.arange(L)[None, None, :] < hypo_lens[:, :, None]).astype(jnp.float32)
    gathered = word_emb[hypo_ids]                                 # (B, S, L, D)
    ref = (gathered * mask[..., None]).sum(axis=2) / hypo_lens[..., None].astype(jnp.float32)

    assert out_fast.shape == (B, S, D)
    err_fast = float(jnp.max(jnp.abs(out_fast - ref)))
    err_hbm = float(jnp.max(jnp.abs(out_hbm - ref)))
    assert jnp.allclose(out_fast, ref, atol=1e-4, rtol=1e-4), err_fast
    assert jnp.allclose(out_hbm, ref, atol=1e-4, rtol=1e-4), err_hbm

    print("KERNEL_OK")
</pallas_src>

<mosaic_0001>
module attributes {stable_mosaic.version = 11 : i64} {
  func.func @_sent_mean_vmem_kernel(%arg0: i32, %arg1: memref<256xi32, #tpu.memory_space<smem>>, %arg2: memref<16xi32, #tpu.memory_space<smem>>, %arg3: memref<1024x384xf32, #tpu.memory_space<vmem>>, %arg4: memref<8x384xf32, #tpu.memory_space<vmem>>) attributes {dimension_semantics = [#tpu.dimension_semantics<parallel>], iteration_bounds = array<i64: 2>, scalar_prefetch = 2 : i64, scratch_operands = 0 : i64, tpu.core_type = #tpu.core_type<tc>, window_params = [{pipeline_mode = #tpu.pipeline_mode<synchronous>, transform_indices = @transform_0, window_bounds = array<i64: 1024, 384>}, {transform_indices = @transform_1, window_bounds = array<i64: 8, 384>}]} {
    %c8_i32 = arith.constant 8 : i32
    %0 = arith.muli %arg0, %c8_i32 : i32
    %c16_i32 = arith.constant 16 : i32
    %1 = arith.muli %0, %c16_i32 : i32
    %c0_i32 = arith.constant 0 : i32
    %c8_i32_0 = arith.constant 8 : i32
    %2 = arith.addi %c0_i32, %c8_i32_0 : i32
    %c1_i32 = arith.constant 1 : i32
    scf.for %arg5 = %c0_i32 to %2 step %c1_i32  : i32 {
      %c8_i32_2 = arith.constant 8 : i32
      %3 = arith.muli %arg0, %c8_i32_2 : i32
      %4 = arith.addi %3, %arg5 : i32
      %5 = arith.index_cast %4 : i32 to index
      %6 = memref.load %arg2[%5] : memref<16xi32, #tpu.memory_space<smem>>
      %cst = arith.constant 0.000000e+00 : f32
      %7 = vector.broadcast %cst : f32 to vector<1x384xf32>
      %c16_i32_3 = arith.constant 16 : i32
      %8 = arith.muli %arg5, %c16_i32_3 : i32
      %9 = arith.addi %1, %8 : i32
      %c0_i32_4 = arith.constant 0 : i32
      %10 = arith.addi %9, %c0_i32_4 : i32
      %11 = arith.index_cast %10 : i32 to index
      %12 = memref.load %arg1[%11] : memref<256xi32, #tpu.memory_space<smem>>
      %13 = arith.index_cast %12 : i32 to index
      %c0 = arith.constant 0 : index
      %14 = vector.load %arg3[%13, %c0] : memref<1024x384xf32, #tpu.memory_space<vmem>>, vector<1x384xf32>
      %c0_i32_5 = arith.constant 0 : i32
      %15 = arith.cmpi sgt, %6, %c0_i32_5 : i32
      %cst_6 = arith.constant 0.000000e+00 : f32
      %16 = vector.broadcast %cst_6 : f32 to vector<1x384xf32>
      %17 = arith.select %15, %14, %16 : vector<1x384xf32>
      %18 = arith.addf %7, %17 : vector<1x384xf32>
      %c16_i32_7 = arith.constant 16 : i32
      %19 = arith.muli %arg5, %c16_i32_7 : i32
      %20 = arith.addi %1, %19 : i32
      %c1_i32_8 = arith.constant 1 : i32
      %21 = arith.addi %20, %c1_i32_8 : i32
      %22 = arith.index_cast %21 : i32 to index
      %23 = memref.load %arg1[%22] : memref<256xi32, #tpu.memory_space<smem>>
      %24 = arith.index_cast %23 : i32 to index
      %c0_9 = arith.constant 0 : index
      %25 = vector.load %arg3[%24, %c0_9] : memref<1024x384xf32, #tpu.memory_space<vmem>>, vector<1x384xf32>
      %c1_i32_10 = arith.constant 1 : i32
      %26 = arith.cmpi sgt, %6, %c1_i32_10 : i32
      %cst_11 = arith.constant 0.000000e+00 : f32
      %27 = vector.broadcast %cst_11 : f32 to vector<1x384xf32>
      %28 = arith.select %26, %25, %27 : vector<1x384xf32>
      %29 = arith.addf %18, %28 : vector<1x384xf32>
      %c16_i32_12 = arith.constant 16 : i32
      %30 = arith.muli %arg5, %c16_i32_12 : i32
      %31 = arith.addi %1, %30 : i32
      %c2_i32 = arith.constant 2 : i32
      %32 = arith.addi %31, %c2_i32 : i32
      %33 = arith.index_cast %32 : i32 to index
      %34 = memref.load %arg1[%33] : memref<256xi32, #tpu.memory_space<smem>>
      %35 = arith.index_cast %34 : i32 to index
      %c0_13 = arith.constant 0 : index
      %36 = vector.load %arg3[%35, %c0_13] : memref<1024x384xf32, #tpu.memory_space<vmem>>, vector<1x384xf32>
      %c2_i32_14 = arith.constant 2 : i32
      %37 = arith.cmpi sgt, %6, %c2_i32_14 : i32
      %cst_15 = arith.constant 0.000000e+00 : f32
      %38 = vector.broadcast %cst_15 : f32 to vector<1x384xf32>
      %39 = arith.select %37, %36, %38 : vector<1x384xf32>
      %40 = arith.addf %29, %39 : vector<1x384xf32>
      %c16_i32_16 = arith.constant 16 : i32
      %41 = arith.muli %arg5, %c16_i32_16 : i32
      %42 = arith.addi %1, %41 : i32
      %c3_i32 = arith.constant 3 : i32
      %43 = arith.addi %42, %c3_i32 : i32
      %44 = arith.index_cast %43 : i32 to index
      %45 = memref.load %arg1[%44] : memref<256xi32, #tpu.memory_space<smem>>
      %46 = arith.index_cast %45 : i32 to index
      %c0_17 = arith.constant 0 : index
      %47 = vector.load %arg3[%46, %c0_17] : memref<1024x384xf32, #tpu.memory_space<vmem>>, vector<1x384xf32>
      %c3_i32_18 = arith.constant 3 : i32
      %48 = arith.cmpi sgt, %6, %c3_i32_18 : i32
      %cst_19 = arith.constant 0.000000e+00 : f32
      %49 = vector.broadcast %cst_19 : f32 to vector<1x384xf32>
      %50 = arith.select %48, %47, %49 : vector<1x384xf32>
      %51 = arith.addf %40, %50 : vector<1x384xf32>
      %c16_i32_20 = arith.constant 16 : i32
      %52 = arith.muli %arg5, %c16_i32_20 : i32
      %53 = arith.addi %1, %52 : i32
      %c4_i32 = arith.constant 4 : i32
      %54 = arith.addi %53, %c4_i32 : i32
      %55 = arith.index_cast %54 : i32 to index
      %56 = memref.load %arg1[%55] : memref<256xi32, #tpu.memory_space<smem>>
      %57 = arith.index_cast %56 : i32 to index
      %c0_21 = arith.constant 0 : index
      %58 = vector.load %arg3[%57, %c0_21] : memref<1024x384xf32, #tpu.memory_space<vmem>>, vector<1x384xf32>
      %c4_i32_22 = arith.constant 4 : i32
      %59 = arith.cmpi sgt, %6, %c4_i32_22 : i32
      %cst_23 = arith.constant 0.000000e+00 : f32
      %60 = vector.broadcast %cst_23 : f32 to vector<1x384xf32>
      %61 = arith.select %59, %58, %60 : vector<1x384xf32>
      %62 = arith.addf %51, %61 : vector<1x384xf32>
      %c16_i32_24 = arith.constant 16 : i32
      %63 = arith.muli %arg5, %c16_i32_24 : i32
      %64 = arith.addi %1, %63 : i32
      %c5_i32 = arith.constant 5 : i32
      %65 = arith.addi %64, %c5_i32 : i32
      %66 = arith.index_cast %65 : i32 to index
      %67 = memref.load %arg1[%66] : memref<256xi32, #tpu.memory_space<smem>>
      %68 = arith.index_cast %67 : i32 to index
      %c0_25 = arith.constant 0 : index
      %69 = vector.load %arg3[%68, %c0_25] : memref<1024x384xf32, #tpu.memory_space<vmem>>, vector<1x384xf32>
      %c5_i32_26 = arith.constant 5 : i32
      %70 = arith.cmpi sgt, %6, %c5_i32_26 : i32
      %cst_27 = arith.constant 0.000000e+00 : f32
      %71 = vector.broadcast %cst_27 : f32 to vector<1x384xf32>
      %72 = arith.select %70, %69, %71 : vector<1x384xf32>
      %73 = arith.addf %62, %72 : vector<1x384xf32>
      %c16_i32_28 = arith.constant 16 : i32
      %74 = arith.muli %arg5, %c16_i32_28 : i32
      %75 = arith.addi %1, %74 : i32
      %c6_i32 = arith.constant 6 : i32
      %76 = arith.addi %75, %c6_i32 : i32
      %77 = arith.index_cast %76 : i32 to index
      %78 = memref.load %arg1[%77] : memref<256xi32, #tpu.memory_space<smem>>
      %79 = arith.index_cast %78 : i32 to index
      %c0_29 = arith.constant 0 : index
      %80 = vector.load %arg3[%79, %c0_29] : memref<1024x384xf32, #tpu.memory_space<vmem>>, vector<1x384xf32>
      %c6_i32_30 = arith.constant 6 : i32
      %81 = arith.cmpi sgt, %6, %c6_i32_30 : i32
      %cst_31 = arith.constant 0.000000e+00 : f32
      %82 = vector.broadcast %cst_31 : f32 to vector<1x384xf32>
      %83 = arith.select %81, %80, %82 : vector<1x384xf32>
      %84 = arith.addf %73, %83 : vector<1x384xf32>
      %c16_i32_32 = arith.constant 16 : i32
      %85 = arith.muli %arg5, %c16_i32_32 : i32
      %86 = arith.addi %1, %85 : i32
      %c7_i32 = arith.constant 7 : i32
      %87 = arith.addi %86, %c7_i32 : i32
      %88 = arith.index_cast %87 : i32 to index
      %89 = memref.load %arg1[%88] : memref<256xi32, #tpu.memory_space<smem>>
      %90 = arith.index_cast %89 : i32 to index
      %c0_33 = arith.constant 0 : index
      %91 = vector.load %arg3[%90, %c0_33] : memref<1024x384xf32, #tpu.memory_space<vmem>>, vector<1x384xf32>
      %c7_i32_34 = arith.constant 7 : i32
      %92 = arith.cmpi sgt, %6, %c7_i32_34 : i32
      %cst_35 = arith.constant 0.000000e+00 : f32
      %93 = vector.broadcast %cst_35 : f32 to vector<1x384xf32>
      %94 = arith.select %92, %91, %93 : vector<1x384xf32>
      %95 = arith.addf %84, %94 : vector<1x384xf32>
      %c16_i32_36 = arith.constant 16 : i32
      %96 = arith.muli %arg5, %c16_i32_36 : i32
      %97 = arith.addi %1, %96 : i32
      %c8_i32_37 = arith.constant 8 : i32
      %98 = arith.addi %97, %c8_i32_37 : i32
      %99 = arith.index_cast %98 : i32 to index
      %100 = memref.load %arg1[%99] : memref<256xi32, #tpu.memory_space<smem>>
      %101 = arith.index_cast %100 : i32 to index
      %c0_38 = arith.constant 0 : index
      %102 = vector.load %arg3[%101, %c0_38] : memref<1024x384xf32, #tpu.memory_space<vmem>>, vector<1x384xf32>
      %c8_i32_39 = arith.constant 8 : i32
      %103 = arith.cmpi sgt, %6, %c8_i32_39 : i32
      %cst_40 = arith.constant 0.000000e+00 : f32
      %104 = vector.broadcast %cst_40 : f32 to vector<1x384xf32>
      %105 = arith.select %103, %102, %104 : vector<1x384xf32>
      %106 = arith.addf %95, %105 : vector<1x384xf32>
      %c16_i32_41 = arith.constant 16 : i32
      %107 = arith.muli %arg5, %c16_i32_41 : i32
      %108 = arith.addi %1, %107 : i32
      %c9_i32 = arith.constant 9 : i32
      %109 = arith.addi %108, %c9_i32 : i32
      %110 = arith.index_cast %109 : i32 to index
      %111 = memref.load %arg1[%110] : memref<256xi32, #tpu.memory_space<smem>>
      %112 = arith.index_cast %111 : i32 to index
      %c0_42 = arith.constant 0 : index
      %113 = vector.load %arg3[%112, %c0_42] : memref<1024x384xf32, #tpu.memory_space<vmem>>, vector<1x384xf32>
      %c9_i32_43 = arith.constant 9 : i32
      %114 = arith.cmpi sgt, %6, %c9_i32_43 : i32
      %cst_44 = arith.constant 0.000000e+00 : f32
      %115 = vector.broadcast %cst_44 : f32 to vector<1x384xf32>
      %116 = arith.select %114, %113, %115 : vector<1x384xf32>
      %117 = arith.addf %106, %116 : vector<1x384xf32>
      %c16_i32_45 = arith.constant 16 : i32
      %118 = arith.muli %arg5, %c16_i32_45 : i32
      %119 = arith.addi %1, %118 : i32
      %c10_i32 = arith.constant 10 : i32
      %120 = arith.addi %119, %c10_i32 : i32
      %121 = arith.index_cast %120 : i32 to index
      %122 = memref.load %arg1[%121] : memref<256xi32, #tpu.memory_space<smem>>
      %123 = arith.index_cast %122 : i32 to index
      %c0_46 = arith.constant 0 : index
      %124 = vector.load %arg3[%123, %c0_46] : memref<1024x384xf32, #tpu.memory_space<vmem>>, vector<1x384xf32>
      %c10_i32_47 = arith.constant 10 : i32
      %125 = arith.cmpi sgt, %6, %c10_i32_47 : i32
      %cst_48 = arith.constant 0.000000e+00 : f32
      %126 = vector.broadcast %cst_48 : f32 to vector<1x384xf32>
      %127 = arith.select %125, %124, %126 : vector<1x384xf32>
      %128 = arith.addf %117, %127 : vector<1x384xf32>
      %c16_i32_49 = arith.constant 16 : i32
      %129 = arith.muli %arg5, %c16_i32_49 : i32
      %130 = arith.addi %1, %129 : i32
      %c11_i32 = arith.constant 11 : i32
      %131 = arith.addi %130, %c11_i32 : i32
      %132 = arith.index_cast %131 : i32 to index
      %133 = memref.load %arg1[%132] : memref<256xi32, #tpu.memory_space<smem>>
      %134 = arith.index_cast %133 : i32 to index
      %c0_50 = arith.constant 0 : index
      %135 = vector.load %arg3[%134, %c0_50] : memref<1024x384xf32, #tpu.memory_space<vmem>>, vector<1x384xf32>
      %c11_i32_51 = arith.constant 11 : i32
      %136 = arith.cmpi sgt, %6, %c11_i32_51 : i32
      %cst_52 = arith.constant 0.000000e+00 : f32
      %137 = vector.broadcast %cst_52 : f32 to vector<1x384xf32>
      %138 = arith.select %136, %135, %137 : vector<1x384xf32>
      %139 = arith.addf %128, %138 : vector<1x384xf32>
      %c16_i32_53 = arith.constant 16 : i32
      %140 = arith.muli %arg5, %c16_i32_53 : i32
      %141 = arith.addi %1, %140 : i32
      %c12_i32 = arith.constant 12 : i32
      %142 = arith.addi %141, %c12_i32 : i32
      %143 = arith.index_cast %142 : i32 to index
      %144 = memref.load %arg1[%143] : memref<256xi32, #tpu.memory_space<smem>>
      %145 = arith.index_cast %144 : i32 to index
      %c0_54 = arith.constant 0 : index
      %146 = vector.load %arg3[%145, %c0_54] : memref<1024x384xf32, #tpu.memory_space<vmem>>, vector<1x384xf32>
      %c12_i32_55 = arith.constant 12 : i32
      %147 = arith.cmpi sgt, %6, %c12_i32_55 : i32
      %cst_56 = arith.constant 0.000000e+00 : f32
      %148 = vector.broadcast %cst_56 : f32 to vector<1x384xf32>
      %149 = arith.select %147, %146, %148 : vector<1x384xf32>
      %150 = arith.addf %139, %149 : vector<1x384xf32>
      %c16_i32_57 = arith.constant 16 : i32
      %151 = arith.muli %arg5, %c16_i32_57 : i32
      %152 = arith.addi %1, %151 : i32
      %c13_i32 = arith.constant 13 : i32
      %153 = arith.addi %152, %c13_i32 : i32
      %154 = arith.index_cast %153 : i32 to index
      %155 = memref.load %arg1[%154] : memref<256xi32, #tpu.memory_space<smem>>
      %156 = arith.index_cast %155 : i32 to index
      %c0_58 = arith.constant 0 : index
      %157 = vector.load %arg3[%156, %c0_58] : memref<1024x384xf32, #tpu.memory_space<vmem>>, vector<1x384xf32>
      %c13_i32_59 = arith.constant 13 : i32
      %158 = arith.cmpi sgt, %6, %c13_i32_59 : i32
      %cst_60 = arith.constant 0.000000e+00 : f32
      %159 = vector.broadcast %cst_60 : f32 to vector<1x384xf32>
      %160 = arith.select %158, %157, %159 : vector<1x384xf32>
      %161 = arith.addf %150, %160 : vector<1x384xf32>
      %c16_i32_61 = arith.constant 16 : i32
      %162 = arith.muli %arg5, %c16_i32_61 : i32
      %163 = arith.addi %1, %162 : i32
      %c14_i32 = arith.constant 14 : i32
      %164 = arith.addi %163, %c14_i32 : i32
      %165 = arith.index_cast %164 : i32 to index
      %166 = memref.load %arg1[%165] : memref<256xi32, #tpu.memory_space<smem>>
      %167 = arith.index_cast %166 : i32 to index
      %c0_62 = arith.constant 0 : index
      %168 = vector.load %arg3[%167, %c0_62] : memref<1024x384xf32, #tpu.memory_space<vmem>>, vector<1x384xf32>
      %c14_i32_63 = arith.constant 14 : i32
      %169 = arith.cmpi sgt, %6, %c14_i32_63 : i32
      %cst_64 = arith.constant 0.000000e+00 : f32
      %170 = vector.broadcast %cst_64 : f32 to vector<1x384xf32>
      %171 = arith.select %169, %168, %170 : vector<1x384xf32>
      %172 = arith.addf %161, %171 : vector<1x384xf32>
      %c16_i32_65 = arith.constant 16 : i32
      %173 = arith.muli %arg5, %c16_i32_65 : i32
      %174 = arith.addi %1, %173 : i32
      %c15_i32 = arith.constant 15 : i32
      %175 = arith.addi %174, %c15_i32 : i32
      %176 = arith.index_cast %175 : i32 to index
      %177 = memref.load %arg1[%176] : memref<256xi32, #tpu.memory_space<smem>>
      %178 = arith.index_cast %177 : i32 to index
      %c0_66 = arith.constant 0 : index
      %179 = vector.load %arg3[%178, %c0_66] : memref<1024x384xf32, #tpu.memory_space<vmem>>, vector<1x384xf32>
      %c15_i32_67 = arith.constant 15 : i32
      %180 = arith.cmpi sgt, %6, %c15_i32_67 : i32
      %cst_68 = arith.constant 0.000000e+00 : f32
      %181 = vector.broadcast %cst_68 : f32 to vector<1x384xf32>
      %182 = arith.select %180, %179, %181 : vector<1x384xf32>
      %183 = arith.addf %172, %182 : vector<1x384xf32>
      %c1_i32_69 = arith.constant 1 : i32
      %184 = arith.maxsi %6, %c1_i32_69 : i32
      %185 = arith.sitofp %184 : i32 to f32
      %cst_70 = arith.constant 1.000000e+00 : f32
      %186 = arith.divf %cst_70, %185 : f32
      %187 = vector.broadcast %186 : f32 to vector<1x384xf32>
      %188 = arith.mulf %183, %187 : vector<1x384xf32>
      %189 = arith.index_cast %arg5 : i32 to index
      %c0_71 = arith.constant 0 : index
      %190 = vector.load %arg4[%189, %c0_71] : memref<8x384xf32, #tpu.memory_space<vmem>>, vector<1x384xf32>
      tpu.vector_store %arg4[%189, %c0_71], %188 {strides = array<i32>} : memref<8x384xf32, #tpu.memory_space<vmem>>, vector<1x384xf32>,
    }
    %c8_i32_1 = arith.constant 8 : i32
    return
  }
  func.func @transform_0(%arg0: i32, %arg1: memref<256xi32, #tpu.memory_space<smem>>, %arg2: memref<16xi32, #tpu.memory_space<smem>>) -> (i32, i32) {
    %c0_i32 = arith.constant 0 : i32
    %c0_i32_0 = arith.constant 0 : i32
    %c0_i32_1 = arith.constant 0 : i32
    return %c0_i32, %c0_i32_0 : i32, i32
  }
  func.func @transform_1(%arg0: i32, %arg1: memref<256xi32, #tpu.memory_space<smem>>, %arg2: memref<16xi32, #tpu.memory_space<smem>>) -> (i32, i32) {
    %c0_i32 = arith.constant 0 : i32
    %c0_i32_0 = arith.constant 0 : i32
    return %arg0, %c0_i32 : i32, i32
  }
}

</mosaic_0001>

<llo_original>
// kernel: tpu_custom_call.1
$region0: #{tpu_custom_call.1}
  #allocation0 [shape = 'u32[]', space=smem, size = 0x4, offset = 0x4, fixed_abs, tag = 'smem constant byte address 0x4 - core index']
  #allocation1 [shape = 'u32[144,128]{1,0:T(1,128)}', space=vmem, size = 0x12000, scoped, tag = 'internal scratch']
  #allocation2 [shape = 's32[1]{0}', space=sflag, size = 0x4, scoped, tag = 'scoped memory for tpu_custom_call.1']
  #allocation3 [shape = 'u8[1024]{0}', space=smem, size = 0x400, scoped, tag = 'prefetched SMEM operand 0']
  #allocation4 [shape = 'u8[512]{0}', space=smem, size = 0x200, scoped, tag = 'prefetched SMEM operand 1']
  %s0 = inlined_call_operand.hbm [shape: s32[256], index: 0, kind: input, shape index: {}]
  %s1 = inlined_call_operand.hbm [shape: s32[16], index: 1, kind: input, shape index: {}]
  %s2 = inlined_call_operand.hbm [shape: f32[1024,384], index: 2, kind: input, shape index: {}]
  %s3 = inlined_call_operand.hbm [shape: f32[16,384], index: 3, kind: output, shape index: {}]
  %s4 = sld [smem:[#allocation0]]
  $region48: #{tpu_custom_call.1} parent=0
    _
  %s6 = ssub.s32 1, %s4
  %s7 = scalar_select 0, %s6, %s4
  %9 = dma.hbm_to_smem %s0, 32, [#allocation3], [#allocation2]
  %11 = dma.hbm_to_smem %s1, 16, [#allocation4], [#allocation2]
  %12 = dma.done [#allocation2], 48
  %13 = sfence
  $region1: #{tpu_custom_call.1} parent=0
    #allocation5 [shape = 'u8[1572864]{0}', space=vmem, size = 0x180000, scoped, tag = 'input window, operand 2, single buffered']
    #allocation6 [shape = 's32[2]{0}', space=sflag, size = 0x8, scoped, tag = 'scoped memory for tpu_custom_call.1']
    #allocation7 [shape = 's32[2]{0}', space=sflag, size = 0x8, scoped, tag = 'scoped memory for tpu_custom_call.1']
    #allocation8 [shape = 'u8[24576]{0}', space=vmem, size = 0x6000, scoped, tag = 'output window, operand 0']
    %14 = vsyncpa [#allocation6], 0
    %15 = vsyncpa [#allocation7], 0
    %s16 = scalar_lea.sflag [#allocation7], 1
    %17 = vsyncpa %s16, 0
    loop: start=0, step=1, limit=4
    $region2: #{tpu_custom_call.1} parent=1 // loop_pre_header
      _
    $region3: #{tpu_custom_call.1} parent=1 // loop_header
      %s19 = sphi 0, %s23
      %p20 = scmp.ge.s32.totalorder %s19, 4
      %s27 = sphi 0, %s27
      %s29 = sphi 0, %s27
      %s30 = sphi 0, %s29
      %s44 = sphi 0, %s30
      %s50 = sphi 0, %s52
      %s53 = sphi 0, %s50
      %s54 = sphi 0, %s53
      %s70 = sphi 0, %s54
    $region4: #{tpu_custom_call.1} parent=1 // loop_header_branch
      %22 = sbr.rel (%p20) target = $region8
    $region5: #{tpu_custom_call.1} parent=1 // loop_body
      %s24 = ssub.s32 %s19, 1
      %s25 = ssub.s32 %s19, 2
      %s26 = sadd.s32 %s19, 1
      %s28 = sadd.s32 %s27, 1
      %p31 = scmp.eq.s32.totalorder %s19, 1
      %p32 = scmp.ne.s32.totalorder %s27, %s29
      %p33 = scmp.eq.s32.totalorder %s19, 0
      %p34 = por %p32, %p33
      %p35 = scmp.ne.s32.totalorder %s27, %s29
      %p36 = scmp.eq.s32.totalorder %s24, 1
      %p37 = por %p35, %p36
      %p38 = scmp.ne.s32.totalorder %s29, %s30
      %p39 = scmp.eq.s32.totalorder %s24, 0
      %p40 = por %p38, %p39
      %p41 = scmp.ne.s32.totalorder %s29, %s30
      %p42 = scmp.eq.s32.totalorder %s25, 1
      %p43 = por %p41, %p42
      %p45 = scmp.ne.s32.totalorder %s30, %s44
      %p46 = scmp.eq.s32.totalorder %s25, 0
      %p47 = por %p45, %p46
      %s48 = ssub.s32 %s19, %s26
      %p49 = scmp.eq.s32.totalorder %s48, 0
      %s51 = sadd.s32 %s50, 1
      %s52 = scalar_select %p49, %s50, %s51
      %p55 = pneg %p49
      %p56 = scmp.eq.s32.totalorder %s19, 1
      %p57 = por %p55, %p56
      %p58 = scmp.ne.s32.totalorder %s50, %s53
      %p59 = scmp.eq.s32.totalorder %s19, 0
      %p60 = por %p58, %p59
      %p61 = scmp.ne.s32.totalorder %s50, %s53
      %p62 = scmp.eq.s32.totalorder %s24, 1
      %p63 = por %p61, %p62
      %p64 = scmp.ne.s32.totalorder %s53, %s54
      %p65 = scmp.eq.s32.totalorder %s24, 0
      %p66 = por %p64, %p65
      %p67 = scmp.ne.s32.totalorder %s53, %s54
      %p68 = scmp.eq.s32.totalorder %s25, 1
      %p69 = por %p67, %p68
      %p71 = scmp.ne.s32.totalorder %s54, %s70
      %p72 = scmp.eq.s32.totalorder %s25, 0
      %p73 = por %p71, %p72
      %p74 = scmp.le.s32.totalorder 1, %s19
      %p75 = scmp.lt.s32.totalorder %s19, 3
      %p76 = pnand %p74, %p75
      %p77 = pneg %p76
      // Predicated region
      $region9: #{tpu_custom_call.1} parent=5 // pred_check
        _
      $region10: #{tpu_custom_call.1} parent=5 // pred_check_branch
        %79 = sbr.rel (%p76) target = $region12
      $region11: #{tpu_custom_call.1} parent=5 // pred_region
        %s80 = ssub.s32 %s19, 1
        // Predicated region
        $region13: #{tpu_custom_call.1} parent=11 // pred_check
          %p81 = pneg %p40
        $region14: #{tpu_custom_call.1} parent=11 // pred_check_branch
          %83 = sbr.rel (%p81) target = $region16
        $region15: #{tpu_custom_call.1} parent=11 // pred_region
          %s85 = ssub.s32 49152, 49152
          %86 = vsyncadd [#allocation6], %s85
          %s87 = sshll.u32 [#allocation5], 4
          %s88 = int_to_ptr.vmem [resolvable:$true] %s87
          %93 = dma.hbm_to_vmem [thread:$0]  %s2, 49152, %s88, [#allocation6], 384, 384, 24
        $region16: #{tpu_custom_call.1} parent=11 // pred_fallthru
          _
      $region12: #{tpu_custom_call.1} parent=5 // pred_fallthru
        _
      %p94 = scmp.lt.s32.totalorder %s19, 2
      // Predicated region
      $region17: #{tpu_custom_call.1} parent=5 // pred_check
        %p95 = pneg %p94
      $region18: #{tpu_custom_call.1} parent=5 // pred_check_branch
        %97 = sbr.rel (%p95) target = $region20
      $region19: #{tpu_custom_call.1} parent=5 // pred_region
        _
      $region20: #{tpu_custom_call.1} parent=5 // pred_fallthru
        _
      %p98 = scmp.le.s32.totalorder 1, %s19
      %p99 = scmp.lt.s32.totalorder %s19, 3
      %p100 = pnand %p98, %p99
      %p101 = pneg %p100
      // Predicated region
      $region21: #{tpu_custom_call.1} parent=5 // pred_check
        _
      $region22: #{tpu_custom_call.1} parent=5 // pred_check_branch
        %103 = sbr.rel (%p100) target = $region24
      $region23: #{tpu_custom_call.1} parent=5 // pred_region
        %s104 = ssub.s32 %s19, 1
        // Predicated region
        $region25: #{tpu_custom_call.1} parent=23 // pred_check
          %p105 = pneg %p40
        $region26: #{tpu_custom_call.1} parent=23 // pred_check_branch
          %107 = sbr.rel (%p105) target = $region28
        $region27: #{tpu_custom_call.1} parent=23 // pred_region
          %108 = dma.done [#allocation6], 49152
        $region28: #{tpu_custom_call.1} parent=23 // pred_fallthru
          _
        %p109 = pneg %p40
        %p110 = pneg %p37
        %p111 = pneg %p66
        %p112 = pneg %p63
        %s113 = sand.u32 %s53, 1
        %s114 = scalar_lea.sflag [#allocation7], %s113
        %s115 = sand.u32 %s53, 1
        %s116 = smul.addr %s115, 24
        %s117 = scalar_lea.vmem [#allocation8], %s116
        %s118 = smul.u32 %s24, 128
        loop: start=0, step=1, limit=8
        $region29: #{tpu_custom_call.1} parent=23 // loop_pre_header
          _
        $region30: #{tpu_custom_call.1} parent=23 // loop_header
          %s120 = sphi 0, %s124
          %p121 = scmp.ge.s32.totalorder %s120, 8
        $region31: #{tpu_custom_call.1} parent=23 // loop_header_branch
          %123 = sbr.rel (%p121) target = $region35
        $region32: #{tpu_custom_call.1} parent=23 // loop_body
          %s125 = smul.u32 %s24, 8
          %s126 = sadd.s32 %s125, %s120
          %s127 = sld [smem:[#allocation4 + %s126]]
          %s128 = smul.u32 %s120, 16
          %s129 = sadd.s32 %s118, %s128
          %s130 = sld [smem:[#allocation3 + %s129]]
          %s131 = sshra.s32 %s130, 3
          %s132 = sand.u32 %s130, 7
          %s133 = sshra.s32 %s130, 3
          %s134 = sand.u32 %s130, 7
          %s135 = smul.u32 %s131, 3
          %s136 = smul.u32 %s135, 8
          %s137 = sadd.s32 %s136, %s134
          %s138 = scalar_lea.vmem [#allocation5], %s137
          %v139 = vld [vmem:[%s138] ss:$8 sm:$0x7]
          %p140 = scmp.gt.s32.totalorder %s127, 0
          %s141 = scalar_select %p140, 1, 0
          %v142 = vstv %s141
          %vm143 = vcmp.eq.s32.totalorder %v142, 1
          %v144 = vsel %vm143, %v139, 0.0
          %v145 = vadd.f32 %v144, 0.0
          %s146 = sadd.s32 %s129, 1
          %s147 = sld [smem:[#allocation3 + %s146]]
          %s148 = sshra.s32 %s147, 3
          %s149 = sand.u32 %s147, 7
          %s150 = sshra.s32 %s147, 3
          %s151 = sand.u32 %s147, 7
          %s152 = smul.u32 %s148, 3
          %s153 = smul.u32 %s152, 8
          %s154 = sadd.s32 %s153, %s151
          %s155 = scalar_lea.vmem [#allocation5], %s154
          %v156 = vld [vmem:[%s155] ss:$8 sm:$0x7]
          %p157 = scmp.gt.s32.totalorder %s127, 1
          %s158 = scalar_select %p157, 1, 0
          %v159 = vstv %s158
          %vm160 = vcmp.eq.s32.totalorder %v159, 1
          %v161 = vsel %vm160, %v156, 0.0
          %v162 = vadd.f32 %v145, %v161
          %s163 = sadd.s32 %s129, 2
          %s164 = sld [smem:[#allocation3 + %s163]]
          %s165 = sshra.s32 %s164, 3
          %s166 = sand.u32 %s164, 7
          %s167 = sshra.s32 %s164, 3
          %s168 = sand.u32 %s164, 7
          %s169 = smul.u32 %s165, 3
          %s170 = smul.u32 %s169, 8
          %s171 = sadd.s32 %s170, %s168
          %s172 = scalar_lea.vmem [#allocation5], %s171
          %v173 = vld [vmem:[%s172] ss:$8 sm:$0x7]
          %p174 = scmp.gt.s32.totalorder %s127, 2
          %s175 = scalar_select %p174, 1, 0
          %v176 = vstv %s175
          %vm177 = vcmp.eq.s32.totalorder %v176, 1
          %v178 = vsel %vm177, %v173, 0.0
          %v179 = vadd.f32 %v162, %v178
          %s180 = sadd.s32 %s129, 3
          %s181 = sld [smem:[#allocation3 + %s180]]
          %s182 = sshra.s32 %s181, 3
          %s183 = sand.u32 %s181, 7
          %s184 = sshra.s32 %s181, 3
          %s185 = sand.u32 %s181, 7
          %s186 = smul.u32 %s182, 3
          %s187 = smul.u32 %s186, 8
          %s188 = sadd.s32 %s187, %s185
          %s189 = scalar_lea.vmem [#allocation5], %s188
          %v190 = vld [vmem:[%s189] ss:$8 sm:$0x7]
          %p191 = scmp.gt.s32.totalorder %s127, 3
          %s192 = scalar_select %p191, 1, 0
          %v193 = vstv %s192
          %vm194 = vcmp.eq.s32.totalorder %v193, 1
          %v195 = vsel %vm194, %v190, 0.0
          %v196 = vadd.f32 %v179, %v195
          %s197 = sadd.s32 %s129, 4
          %s198 = sld [smem:[#allocation3 + %s197]]
          %s199 = sshra.s32 %s198, 3
          %s200 = sand.u32 %s198, 7
          %s201 = sshra.s32 %s198, 3
          %s202 = sand.u32 %s198, 7
          %s203 = smul.u32 %s199, 3
          %s204 = smul.u32 %s203, 8
          %s205 = sadd.s32 %s204, %s202
          %s206 = scalar_lea.vmem [#allocation5], %s205
          %v207 = vld [vmem:[%s206] ss:$8 sm:$0x7]
          %p208 = scmp.gt.s32.totalorder %s127, 4
          %s209 = scalar_select %p208, 1, 0
          %v210 = vstv %s209
          %vm211 = vcmp.eq.s32.totalorder %v210, 1
          %v212 = vsel %vm211, %v207, 0.0
          %v213 = vadd.f32 %v196, %v212
          %s214 = sadd.s32 %s129, 5
          %s215 = sld [smem:[#allocation3 + %s214]]
          %s216 = sshra.s32 %s215, 3
          %s217 = sand.u32 %s215, 7
          %s218 = sshra.s32 %s215, 3
          %s219 = sand.u32 %s215, 7
          %s220 = smul.u32 %s216, 3
          %s221 = smul.u32 %s220, 8
          %s222 = sadd.s32 %s221, %s219
          %s223 = scalar_lea.vmem [#allocation5], %s222
          %v224 = vld [vmem:[%s223] ss:$8 sm:$0x7]
          %p225 = scmp.gt.s32.totalorder %s127, 5
          %s226 = scalar_select %p225, 1, 0
          %v227 = vstv %s226
          %vm228 = vcmp.eq.s32.totalorder %v227, 1
          %v229 = vsel %vm228, %v224, 0.0
          %v230 = vadd.f32 %v213, %v229
          %s231 = sadd.s32 %s129, 6
          %s232 = sld [smem:[#allocation3 + %s231]]
          %s233 = sshra.s32 %s232, 3
          %s234 = sand.u32 %s232, 7
          %s235 = sshra.s32 %s232, 3
          %s236 = sand.u32 %s232, 7
          %s237 = smul.u32 %s233, 3
          %s238 = smul.u32 %s237, 8
          %s239 = sadd.s32 %s238, %s236
          %s240 = scalar_lea.vmem [#allocation5], %s239
          %v241 = vld [vmem:[%s240] ss:$8 sm:$0x7]
          %p242 = scmp.gt.s32.totalorder %s127, 6
          %s243 = scalar_select %p242, 1, 0
          %v244 = vstv %s243
          %vm245 = vcmp.eq.s32.totalorder %v244, 1
          %v246 = vsel %vm245, %v241, 0.0
          %v247 = vadd.f32 %v230, %v246
          %s248 = sadd.s32 %s129, 7
          %s249 = sld [smem:[#allocation3 + %s248]]
          %s250 = sshra.s32 %s249, 3
          %s251 = sand.u32 %s249, 7
          %s252 = sshra.s32 %s249, 3
          %s253 = sand.u32 %s249, 7
          %s254 = smul.u32 %s250, 3
          %s255 = smul.u32 %s254, 8
          %s256 = sadd.s32 %s255, %s253
          %s257 = scalar_lea.vmem [#allocation5], %s256
          %v258 = vld [vmem:[%s257] ss:$8 sm:$0x7]
          %p259 = scmp.gt.s32.totalorder %s127, 7
          %s260 = scalar_select %p259, 1, 0
          %v261 = vstv %s260
          %vm262 = vcmp.eq.s32.totalorder %v261, 1
          %v263 = vsel %vm262, %v258, 0.0
          %v264 = vadd.f32 %v247, %v263
          %s265 = sadd.s32 %s129, 8
          %s266 = sld [smem:[#allocation3 + %s265]]
          %s267 = sshra.s32 %s266, 3
          %s268 = sand.u32 %s266, 7
          %s269 = sshra.s32 %s266, 3
          %s270 = sand.u32 %s266, 7
          %s271 = smul.u32 %s267, 3
          %s272 = smul.u32 %s271, 8
          %s273 = sadd.s32 %s272, %s270
          %s274 = scalar_lea.vmem [#allocation5], %s273
          %v275 = vld [vmem:[%s274] ss:$8 sm:$0x7]
          %p276 = scmp.gt.s32.totalorder %s127, 8
          %s277 = scalar_select %p276, 1, 0
          %v278 = vstv %s277
          %vm279 = vcmp.eq.s32.totalorder %v278, 1
          %v280 = vsel %vm279, %v275, 0.0
          %v281 = vadd.f32 %v264, %v280
          %s282 = sadd.s32 %s129, 9
          %s283 = sld [smem:[#allocation3 + %s282]]
          %s284 = sshra.s32 %s283, 3
          %s285 = sand.u32 %s283, 7
          %s286 = sshra.s32 %s283, 3
          %s287 = sand.u32 %s283, 7
          %s288 = smul.u32 %s284, 3
          %s289 = smul.u32 %s288, 8
          %s290 = sadd.s32 %s289, %s287
          %s291 = scalar_lea.vmem [#allocation5], %s290
          %v292 = vld [vmem:[%s291] ss:$8 sm:$0x7]
          %p293 = scmp.gt.s32.totalorder %s127, 9
          %s294 = scalar_select %p293, 1, 0
          %v295 = vstv %s294
          %vm296 = vcmp.eq.s32.totalorder %v295, 1
          %v297 = vsel %vm296, %v292, 0.0
          %v298 = vadd.f32 %v281, %v297
          %s299 = sadd.s32 %s129, 10
          %s300 = sld [smem:[#allocation3 + %s299]]
          %s301 = sshra.s32 %s300, 3
          %s302 = sand.u32 %s300, 7
          %s303 = sshra.s32 %s300, 3
          %s304 = sand.u32 %s300, 7
          %s305 = smul.u32 %s301, 3
          %s306 = smul.u32 %s305, 8
          %s307 = sadd.s32 %s306, %s304
          %s308 = scalar_lea.vmem [#allocation5], %s307
          %v309 = vld [vmem:[%s308] ss:$8 sm:$0x7]
          %p310 = scmp.gt.s32.totalorder %s127, 10
          %s311 = scalar_select %p310, 1, 0
          %v312 = vstv %s311
          %vm313 = vcmp.eq.s32.totalorder %v312, 1
          %v314 = vsel %vm313, %v309, 0.0
          %v315 = vadd.f32 %v298, %v314
          %s316 = sadd.s32 %s129, 11
          %s317 = sld [smem:[#allocation3 + %s316]]
          %s318 = sshra.s32 %s317, 3
          %s319 = sand.u32 %s317, 7
          %s320 = sshra.s32 %s317, 3
          %s321 = sand.u32 %s317, 7
          %s322 = smul.u32 %s318, 3
          %s323 = smul.u32 %s322, 8
          %s324 = sadd.s32 %s323, %s321
          %s325 = scalar_lea.vmem [#allocation5], %s324
          %v326 = vld [vmem:[%s325] ss:$8 sm:$0x7]
          %p327 = scmp.gt.s32.totalorder %s127, 11
          %s328 = scalar_select %p327, 1, 0
          %v329 = vstv %s328
          %vm330 = vcmp.eq.s32.totalorder %v329, 1
          %v331 = vsel %vm330, %v326, 0.0
          %v332 = vadd.f32 %v315, %v331
          %s333 = sadd.s32 %s129, 12
          %s334 = sld [smem:[#allocation3 + %s333]]
          %s335 = sshra.s32 %s334, 3
          %s336 = sand.u32 %s334, 7
          %s337 = sshra.s32 %s334, 3
          %s338 = sand.u32 %s334, 7
          %s339 = smul.u32 %s335, 3
          %s340 = smul.u32 %s339, 8
          %s341 = sadd.s32 %s340, %s338
          %s342 = scalar_lea.vmem [#allocation5], %s341
          %v343 = vld [vmem:[%s342] ss:$8 sm:$0x7]
          %p344 = scmp.gt.s32.totalorder %s127, 12
          %s345 = scalar_select %p344, 1, 0
          %v346 = vstv %s345
          %vm347 = vcmp.eq.s32.totalorder %v346, 1
          %v348 = vsel %vm347, %v343, 0.0
          %v349 = vadd.f32 %v332, %v348
          %s350 = sadd.s32 %s129, 13
          %s351 = sld [smem:[#allocation3 + %s350]]
          %s352 = sshra.s32 %s351, 3
          %s353 = sand.u32 %s351, 7
          %s354 = sshra.s32 %s351, 3
          %s355 = sand.u32 %s351, 7
          %s356 = smul.u32 %s352, 3
          %s357 = smul.u32 %s356, 8
          %s358 = sadd.s32 %s357, %s355
          %s359 = scalar_lea.vmem [#allocation5], %s358
          %v360 = vld [vmem:[%s359] ss:$8 sm:$0x7]
          %p361 = scmp.gt.s32.totalorder %s127, 13
          %s362 = scalar_select %p361, 1, 0
          %v363 = vstv %s362
          %vm364 = vcmp.eq.s32.totalorder %v363, 1
          %v365 = vsel %vm364, %v360, 0.0
          %v366 = vadd.f32 %v349, %v365
          %s367 = sadd.s32 %s129, 14
          %s368 = sld [smem:[#allocation3 + %s367]]
          %s369 = sshra.s32 %s368, 3
          %s370 = sand.u32 %s368, 7
          %s371 = sshra.s32 %s368, 3
          %s372 = sand.u32 %s368, 7
          %s373 = smul.u32 %s369, 3
          %s374 = smul.u32 %s373, 8
          %s375 = sadd.s32 %s374, %s372
          %s376 = scalar_lea.vmem [#allocation5], %s375
          %v377 = vld [vmem:[%s376] ss:$8 sm:$0x7]
          %p378 = scmp.gt.s32.totalorder %s127, 14
          %s379 = scalar_select %p378, 1, 0
          %v380 = vstv %s379
          %vm381 = vcmp.eq.s32.totalorder %v380, 1
          %v382 = vsel %vm381, %v377, 0.0
          %v383 = vadd.f32 %v366, %v382
          %s384 = sadd.s32 %s129, 15
          %s385 = sld [smem:[#allocation3 + %s384]]
          %s386 = sshra.s32 %s385, 3
          %s387 = sand.u32 %s385, 7
          %s388 = sshra.s32 %s385, 3
          %s389 = sand.u32 %s385, 7
          %s390 = smul.u32 %s386, 3
          %s391 = smul.u32 %s390, 8
          %s392 = sadd.s32 %s391, %s389
          %s393 = scalar_lea.vmem [#allocation5], %s392
          %v394 = vld [vmem:[%s393] ss:$8 sm:$0x7]
          %p395 = scmp.gt.s32.totalorder %s127, 15
          %s396 = scalar_select %p395, 1, 0
          %v397 = vstv %s396
          %vm398 = vcmp.eq.s32.totalorder %v397, 1
          %v399 = vsel %vm398, %v394, 0.0
          %v400 = vadd.f32 %v383, %v399
          %p401 = scmp.gt.s32.totalorder %s127, 1
          %s402 = scalar_select %p401, %s127, 1
          %s403 = scvt.s32.f32 %s402
          %v404 = vstv %s403
          %v405 = vrcp.pop %v404
          %s406 = vtos %v405
          %v407 = vstv %s406
          %v408 = vmul.f32 %v400, %v407
          %v409 = vlaneseq
          %vm410 = vcmp.ge.s32.totalorder %v409, 0
          %vm411 = vcmp.lt.s32.totalorder %v409, 384
          %vm412 = vmand %vm410, %vm411
          %s413 = sshra.s32 %s120, 3
          %s414 = sand.u32 %s120, 7
          %s415 = sshra.s32 %s120, 3
          %s416 = sand.u32 %s120, 7
          %s417 = smul.u32 %s413, 3
          %s418 = smul.u32 %s417, 8
          %s419 = sadd.s32 %s418, %s416
          %s420 = scalar_lea.vmem %s117, %s419 [#allocation8]
          %421 = vst.msk [vmem:[%s420] ss:$8 sm:$0x7] %vm412, %v408
          %422 = vst.msk [vmem:[%s420] ss:$8 sm:$0x0] %vm412, %v408
        $region33: #{tpu_custom_call.1} parent=23 // loop_footer
          %s124 = sadd.s32 1, %s120
        $region34: #{tpu_custom_call.1} parent=23 // loop_footer_branch
          %119 = sbr.rel target = $region30
        $region35: #{tpu_custom_call.1} parent=23 // loop_exit
          _
        %s423 = sand.u32 %s53, 1
        %s424 = scalar_lea.sflag [#allocation7], %s423
        %s425 = sand.u32 %s53, 1
        %s426 = smul.addr %s425, 24
        %s427 = scalar_lea.vmem [#allocation8], %s426
        // Predicated region
        $region36: #{tpu_custom_call.1} parent=23 // pred_check
          %p428 = pneg %p63
        $region37: #{tpu_custom_call.1} parent=23 // pred_check_branch
          %430 = sbr.rel (%p428) target = $region39
        $region38: #{tpu_custom_call.1} parent=23 // pred_region
          %s432 = ssub.s32 384, 384
          %433 = vsyncadd %s424, %s432
          %s434 = smul.addr %s24, 3
          %s435 = smul.addr %s434, 128
          %s436 = scalar_lea.hbm %s3, %s435
          %s438 = sshll.u32 %s427, 4
          %s439 = int_to_ptr.vmem [resolvable:$true] %s438
          %441 = dma.vmem_to_hbm [thread:$0]  %s439, 384, %s436, %s424
        $region39: #{tpu_custom_call.1} parent=23 // pred_fallthru
          _
      $region24: #{tpu_custom_call.1} parent=5 // pred_fallthru
        _
      %p442 = scmp.le.s32.totalorder 2, %s19
      // Predicated region
      $region40: #{tpu_custom_call.1} parent=5 // pred_check
        %p443 = pneg %p442
      $region41: #{tpu_custom_call.1} parent=5 // pred_check_branch
        %445 = sbr.rel (%p443) target = $region43
      $region42: #{tpu_custom_call.1} parent=5 // pred_region
        %s446 = ssub.s32 %s19, 2
        // Predicated region
        $region44: #{tpu_custom_call.1} parent=42 // pred_check
          %p447 = pneg %p69
        $region45: #{tpu_custom_call.1} parent=42 // pred_check_branch
          %449 = sbr.rel (%p447) target = $region47
        $region46: #{tpu_custom_call.1} parent=42 // pred_region
          %s450 = sand.u32 %s54, 1
          %s451 = scalar_lea.sflag [#allocation7], %s450
          %s452 = sand.u32 %s54, 1
          %s453 = smul.addr %s452, 24
          %s454 = scalar_lea.vmem [#allocation8], %s453
          %455 = dma.done %s451, 384
        $region47: #{tpu_custom_call.1} parent=42 // pred_fallthru
          _
      $region43: #{tpu_custom_call.1} parent=5 // pred_fallthru
        _
    $region6: #{tpu_custom_call.1} parent=1 // loop_footer
      %s23 = sadd.s32 1, %s19
    $region7: #{tpu_custom_call.1} parent=1 // loop_footer_branch
      %18 = sbr.rel target = $region3
    $region8: #{tpu_custom_call.1} parent=1 // loop_exit
      _
    %456 = vsyncpa [#allocation6], 1
    %s457 = scalar_lea.sflag [#allocation6], 1
    %458 = vsyncpa %s457, 1
    %459 = vsyncpa [#allocation7], 1
    %s460 = scalar_lea.sflag [#allocation7], 1
    %461 = vsyncpa %s460, 1

</llo_original>
